<compile_context>
chip_gen: v6e
topology: v6e:2x2x1
jax: 0.10.0
libtpu: 0.0.40
codegen_flags: <defaults>
</compile_context>

<pallas_src>
import jax
import jax.numpy as jnp
from jax.experimental import pallas as pl
from jax.experimental.pallas import tpu as pltpu

HIDDEN = 100
LANE = 128
SUBLANE = 8


def _round_up(n, m):
    return ((n + m - 1) // m) * m


def _pad_to(a, shape):
    pads = [(0, s - d) for d, s in zip(a.shape, shape)]
    return jnp.pad(a, pads)


def mlp_kernel(x_ref, w1_ref, b1_ref, w2_ref, b2_ref, w3_ref, b3_ref, o_ref):
    # One batch tile per grid step; all three matmuls + bias + ReLU fused.
    # bf16 operands on the MXU, f32 accumulation, f32 biases.
    x = x_ref[...]                                                     # (TB, D_in) bf16
    h1 = jnp.dot(x, w1_ref[...], preferred_element_type=jnp.float32) + b1_ref[...]
    h1 = jnp.maximum(h1, 0.0).astype(jnp.bfloat16)
    h2 = jnp.dot(h1, w2_ref[...], preferred_element_type=jnp.float32) + b2_ref[...]
    h2 = jnp.maximum(h2, 0.0).astype(jnp.bfloat16)
    out = jnp.dot(h2, w3_ref[...], preferred_element_type=jnp.float32) + b3_ref[...]
    o_ref[...] = out.astype(o_ref.dtype)                               # (TB, 128) f32


def network_forward(x, params, *, block_b=128):
    """y = relu(x @ W1 + b1) -> relu(. @ W2 + b2) -> . @ W3 + b3"""
    w1, b1, w2, b2, w3, b3 = params
    B, d_in = x.shape
    hid = w1.shape[1]
    out_dim = w3.shape[1]

    hid_p = _round_up(hid, LANE)      # 100 -> 128
    out_p = _round_up(out_dim, LANE)  # e.g. 2 -> 128
    TB = block_b if B >= block_b else _round_up(B, SUBLANE)
    B_p = _round_up(B, TB)

    # Zero-padding is a no-op through ReLU and the zero-padded weight rows.
    x_p = _pad_to(x, (B_p, d_in)).astype(jnp.bfloat16)
    w1_p = _pad_to(w1, (d_in, hid_p)).astype(jnp.bfloat16)
    w2_p = _pad_to(w2, (hid_p, hid_p)).astype(jnp.bfloat16)
    w3_p = _pad_to(w3, (hid_p, out_p)).astype(jnp.bfloat16)
    b1_p = _pad_to(b1, (1, hid_p)).astype(jnp.float32)
    b2_p = _pad_to(b2, (1, hid_p)).astype(jnp.float32)
    b3_p = _pad_to(b3, (1, out_p)).astype(jnp.float32)

    resident = lambda shape: pl.BlockSpec(shape, lambda i: (0, 0))  # VMEM-resident

    out_padded = pl.pallas_call(
        mlp_kernel,
        out_shape=jax.ShapeDtypeStruct((B_p, out_p), jnp.float32),
        grid=(B_p // TB,),
        in_specs=[
            pl.BlockSpec((TB, d_in), lambda i: (i, 0)),   # x tile streams
            resident((d_in, hid_p)),
            resident((1, hid_p)),
            resident((hid_p, hid_p)),
            resident((1, hid_p)),
            resident((hid_p, out_p)),
            resident((1, out_p)),
        ],
        out_specs=pl.BlockSpec((TB, out_p), lambda i: (i, 0)),
        compiler_params=pltpu.CompilerParams(
            dimension_semantics=("parallel",),
        ),
    )(x_p, w1_p, b1_p, w2_p, b2_p, w3_p, b3_p)

    return out_padded[:B, :out_dim]


def init_params(key, input_dim, output_dim):
    # Deterministic init mimicking torch.nn.Linear: U(-1/sqrt(fan_in), 1/sqrt(fan_in)).
    # Weights stored [fan_in, fan_out] so the kernel computes x @ W + b directly.
    def linear(key, fan_in, fan_out):
        kw, kb = jax.random.split(key)
        bound = 1.0 / jnp.sqrt(fan_in)
        w = jax.random.uniform(kw, (fan_in, fan_out), jnp.float32, -bound, bound)
        b = jax.random.uniform(kb, (1, fan_out), jnp.float32, -bound, bound)
        return w, b

    k1, k2, k3 = jax.random.split(key, 3)
    w1, b1 = linear(k1, input_dim, HIDDEN)
    w2, b2 = linear(k2, HIDDEN, HIDDEN)
    w3, b3 = linear(k3, HIDDEN, output_dim)
    return (w1, b1, w2, b2, w3, b3)


def reference_forward(x, params):
    w1, b1, w2, b2, w3, b3 = params
    h1 = jnp.maximum(x @ w1 + b1, 0.0)
    h2 = jnp.maximum(h1 @ w2 + b2, 0.0)
    return h2 @ w3 + b3


if __name__ == "__main__":
    key = jax.random.PRNGKey(0)
    kx, kx2, kp = jax.random.split(key, 3)

    input_dim = 4    # e.g. CartPole state dimension
    output_dim = 2   # e.g. number of discrete actions
    params = init_params(kp, input_dim, output_dim)

    # Small single-tile case (batch padded to 8 sublanes internally).
    x_small = jax.random.normal(kx, (2, input_dim), jnp.float32)
    out_small = jax.block_until_ready(network_forward(x_small, params))
    ref_small = reference_forward(x_small, params)
    assert out_small.shape == (2, output_dim)
    assert jnp.allclose(out_small, ref_small, atol=2e-2, rtol=2e-2)

    # Batched case exercising the batch grid (260 -> padded 384, grid=(3,)).
    x_big = jax.random.normal(kx2, (260, input_dim), jnp.float32)
    out_big = jax.block_until_ready(network_forward(x_big, params))
    ref_big = reference_forward(x_big, params)
    assert out_big.shape == (260, output_dim)
    assert jnp.allclose(out_big, ref_big, atol=2e-2, rtol=2e-2)

    print("KERNEL_OK")
</pallas_src>

<mosaic_0001>
module attributes {stable_mosaic.version = 11 : i64} {
  func.func @mlp_kernel(%arg0: i32, %arg1: memref<8x4xbf16, #tpu.memory_space<vmem>>, %arg2: memref<4x128xbf16, #tpu.memory_space<vmem>>, %arg3: memref<1x128xf32, #tpu.memory_space<vmem>>, %arg4: memref<128x128xbf16, #tpu.memory_space<vmem>>, %arg5: memref<1x128xf32, #tpu.memory_space<vmem>>, %arg6: memref<128x128xbf16, #tpu.memory_space<vmem>>, %arg7: memref<1x128xf32, #tpu.memory_space<vmem>>, %arg8: memref<8x128xf32, #tpu.memory_space<vmem>>) attributes {dimension_semantics = [#tpu.dimension_semantics<parallel>], iteration_bounds = array<i64: 1>, scalar_prefetch = 0 : i64, scratch_operands = 0 : i64, tpu.core_type = #tpu.core_type<tc>, window_params = [{transform_indices = @transform_0, window_bounds = array<i64: 8, 4>}, {pipeline_mode = #tpu.pipeline_mode<synchronous>, transform_indices = @transform_1, window_bounds = array<i64: 4, 128>}, {pipeline_mode = #tpu.pipeline_mode<synchronous>, transform_indices = @transform_2, window_bounds = array<i64: 1, 128>}, {pipeline_mode = #tpu.pipeline_mode<synchronous>, transform_indices = @transform_3, window_bounds = array<i64: 128, 128>}, {pipeline_mode = #tpu.pipeline_mode<synchronous>, transform_indices = @transform_4, window_bounds = array<i64: 1, 128>}, {pipeline_mode = #tpu.pipeline_mode<synchronous>, transform_indices = @transform_5, window_bounds = array<i64: 128, 128>}, {pipeline_mode = #tpu.pipeline_mode<synchronous>, transform_indices = @transform_6, window_bounds = array<i64: 1, 128>}, {transform_indices = @transform_7, window_bounds = array<i64: 8, 128>}]} {
    %c0 = arith.constant 0 : index
    %c0_0 = arith.constant 0 : index
    %0 = vector.load %arg1[%c0, %c0_0] : memref<8x4xbf16, #tpu.memory_space<vmem>>, vector<8x4xbf16>
    %c0_1 = arith.constant 0 : index
    %c0_2 = arith.constant 0 : index
    %1 = vector.load %arg2[%c0_1, %c0_2] : memref<4x128xbf16, #tpu.memory_space<vmem>>, vector<4x128xbf16>
    %cst = arith.constant dense<0.000000e+00> : vector<8x128xf32>
    %2 = tpu.matmul %0, %1, %cst {dimension_numbers = #tpu.dot_dimension_numbers<[1], [0], [0], [1], [0, 0, 1, 1], [], []>} : vector<8x4xbf16>, vector<4x128xbf16>, vector<8x128xf32> -> vector<8x128xf32>
    %c0_3 = arith.constant 0 : index
    %c0_4 = arith.constant 0 : index
    %3 = vector.load %arg3[%c0_3, %c0_4] : memref<1x128xf32, #tpu.memory_space<vmem>>, vector<1x128xf32>
    %4 = vector.broadcast %3 : vector<1x128xf32> to vector<8x128xf32>
    %5 = arith.addf %2, %4 : vector<8x128xf32>
    %cst_5 = arith.constant 0.000000e+00 : f32
    %6 = vector.broadcast %cst_5 : f32 to vector<8x128xf32>
    %7 = arith.maximumf %5, %6 : vector<8x128xf32>
    %8 = arith.truncf %7 : vector<8x128xf32> to vector<8x128xbf16>
    %c0_6 = arith.constant 0 : index
    %c0_7 = arith.constant 0 : index
    %9 = vector.load %arg4[%c0_6, %c0_7] : memref<128x128xbf16, #tpu.memory_space<vmem>>, vector<128x128xbf16>
    %cst_8 = arith.constant dense<0.000000e+00> : vector<8x128xf32>
    %10 = tpu.matmul %8, %9, %cst_8 {dimension_numbers = #tpu.dot_dimension_numbers<[1], [0], [0], [1], [0, 0, 1, 1], [], []>} : vector<8x128xbf16>, vector<128x128xbf16>, vector<8x128xf32> -> vector<8x128xf32>
    %c0_9 = arith.constant 0 : index
    %c0_10 = arith.constant 0 : index
    %11 = vector.load %arg5[%c0_9, %c0_10] : memref<1x128xf32, #tpu.memory_space<vmem>>, vector<1x128xf32>
    %12 = vector.broadcast %11 : vector<1x128xf32> to vector<8x128xf32>
    %13 = arith.addf %10, %12 : vector<8x128xf32>
    %cst_11 = arith.constant 0.000000e+00 : f32
    %14 = vector.broadcast %cst_11 : f32 to vector<8x128xf32>
    %15 = arith.maximumf %13, %14 : vector<8x128xf32>
    %16 = arith.truncf %15 : vector<8x128xf32> to vector<8x128xbf16>
    %c0_12 = arith.constant 0 : index
    %c0_13 = arith.constant 0 : index
    %17 = vector.load %arg6[%c0_12, %c0_13] : memref<128x128xbf16, #tpu.memory_space<vmem>>, vector<128x128xbf16>
    %cst_14 = arith.constant dense<0.000000e+00> : vector<8x128xf32>
    %18 = tpu.matmul %16, %17, %cst_14 {dimension_numbers = #tpu.dot_dimension_numbers<[1], [0], [0], [1], [0, 0, 1, 1], [], []>} : vector<8x128xbf16>, vector<128x128xbf16>, vector<8x128xf32> -> vector<8x128xf32>
    %c0_15 = arith.constant 0 : index
    %c0_16 = arith.constant 0 : index
    %19 = vector.load %arg7[%c0_15, %c0_16] : memref<1x128xf32, #tpu.memory_space<vmem>>, vector<1x128xf32>
    %20 = vector.broadcast %19 : vector<1x128xf32> to vector<8x128xf32>
    %21 = arith.addf %18, %20 : vector<8x128xf32>
    %c0_17 = arith.constant 0 : index
    %c0_18 = arith.constant 0 : index
    %22 = vector.load %arg8[%c0_17, %c0_18] : memref<8x128xf32, #tpu.memory_space<vmem>>, vector<8x128xf32>
    tpu.vector_store %arg8[%c0_17, %c0_18], %21 {strides = array<i32>} : memref<8x128xf32, #tpu.memory_space<vmem>>, vector<8x128xf32>,
    return
  }
  func.func @transform_0(%arg0: i32) -> (i32, i32) {
    %c0_i32 = arith.constant 0 : i32
    %c0_i32_0 = arith.constant 0 : i32
    return %arg0, %c0_i32 : i32, i32
  }
  func.func @transform_1(%arg0: i32) -> (i32, i32) {
    %c0_i32 = arith.constant 0 : i32
    %c0_i32_0 = arith.constant 0 : i32
    %c0_i32_1 = arith.constant 0 : i32
    return %c0_i32, %c0_i32_0 : i32, i32
  }
  func.func @transform_2(%arg0: i32) -> (i32, i32) {
    %c0_i32 = arith.constant 0 : i32
    %c0_i32_0 = arith.constant 0 : i32
    %c0_i32_1 = arith.constant 0 : i32
    return %c0_i32, %c0_i32_0 : i32, i32
  }
  func.func @transform_3(%arg0: i32) -> (i32, i32) {
    %c0_i32 = arith.constant 0 : i32
    %c0_i32_0 = arith.constant 0 : i32
    %c0_i32_1 = arith.constant 0 : i32
    return %c0_i32, %c0_i32_0 : i32, i32
  }
  func.func @transform_4(%arg0: i32) -> (i32, i32) {
    %c0_i32 = arith.constant 0 : i32
    %c0_i32_0 = arith.constant 0 : i32
    %c0_i32_1 = arith.constant 0 : i32
    return %c0_i32, %c0_i32_0 : i32, i32
  }
  func.func @transform_5(%arg0: i32) -> (i32, i32) {
    %c0_i32 = arith.constant 0 : i32
    %c0_i32_0 = arith.constant 0 : i32
    %c0_i32_1 = arith.constant 0 : i32
    return %c0_i32, %c0_i32_0 : i32, i32
  }
  func.func @transform_6(%arg0: i32) -> (i32, i32) {
    %c0_i32 = arith.constant 0 : i32
    %c0_i32_0 = arith.constant 0 : i32
    %c0_i32_1 = arith.constant 0 : i32
    return %c0_i32, %c0_i32_0 : i32, i32
  }
  func.func @transform_7(%arg0: i32) -> (i32, i32) {
    %c0_i32 = arith.constant 0 : i32
    %c0_i32_0 = arith.constant 0 : i32
    return %arg0, %c0_i32 : i32, i32
  }
}

</mosaic_0001>

<llo_original>
// kernel: tpu_custom_call.1
$region0: #{tpu_custom_call.1}
  #allocation0 [shape = 'u32[]', space=smem, size = 0x4, offset = 0x4, fixed_abs, tag = 'smem constant byte address 0x4 - core index']
  #allocation1 [shape = 'u32[144,128]{1,0:T(1,128)}', space=vmem, size = 0x12000, scoped, tag = 'internal scratch']
  %s0 = inlined_call_operand.vmem [shape: bf16[8,4], index: 0, kind: input, shape index: {}]
  %s1 = inlined_call_operand.vmem [shape: bf16[4,128], index: 1, kind: input, shape index: {}]
  %s2 = inlined_call_operand.vmem [shape: f32[1,128], index: 2, kind: input, shape index: {}]
  %s3 = inlined_call_operand.hbm [shape: bf16[128,128], index: 3, kind: input, shape index: {}]
  %s4 = inlined_call_operand.vmem [shape: f32[1,128], index: 4, kind: input, shape index: {}]
  %s5 = inlined_call_operand.hbm [shape: bf16[128,128], index: 5, kind: input, shape index: {}]
  %s6 = inlined_call_operand.vmem [shape: f32[1,128], index: 6, kind: input, shape index: {}]
  %s7 = inlined_call_operand.hbm [shape: f32[8,128], index: 7, kind: output, shape index: {}]
  %s8 = sld [smem:[#allocation0]]
  $region46: #{tpu_custom_call.1} parent=0
    _
  %s10 = ssub.s32 1, %s8
  %s11 = scalar_select 0, %s10, %s8
  $region1: #{tpu_custom_call.1} parent=0
    #allocation2 [shape = 'u8[32768]{0}', space=vmem, size = 0x8000, scoped, tag = 'input window, operand 3, single buffered']
    #allocation3 [shape = 's32[1]{0}', space=sflag, size = 0x4, scoped, tag = 'scoped memory for tpu_custom_call.1']
    #allocation4 [shape = 's32[1]{0}', space=sflag, size = 0x4, scoped, tag = 'scoped memory for tpu_custom_call.1']
    #allocation5 [shape = 'u8[32768]{0}', space=vmem, size = 0x8000, scoped, tag = 'input window, operand 5, single buffered']
    #allocation6 [shape = 's32[1]{0}', space=sflag, size = 0x4, scoped, tag = 'scoped memory for tpu_custom_call.1']
    #allocation7 [shape = 'u8[4096]{0}', space=vmem, size = 0x1000, scoped, tag = 'output window, operand 0, single buffered']
    %12 = vsyncpa [#allocation3], 0
    %13 = vsyncpa [#allocation6], 0
    %14 = vsyncpa [#allocation4], 0
    // Predicated region
    $region2: #{tpu_custom_call.1} parent=1 // pred_check
      _
    $region3: #{tpu_custom_call.1} parent=1 // pred_check_branch
      %16 = sbr.rel (0) target = $region5
    $region4: #{tpu_custom_call.1} parent=1 // pred_region
      _
    $region5: #{tpu_custom_call.1} parent=1 // pred_fallthru
      _
    // Predicated region
    $region6: #{tpu_custom_call.1} parent=1 // pred_check
      _
    $region7: #{tpu_custom_call.1} parent=1 // pred_check_branch
      %18 = sbr.rel (0) target = $region9
    $region8: #{tpu_custom_call.1} parent=1 // pred_region
      _
    $region9: #{tpu_custom_call.1} parent=1 // pred_fallthru
      _
    // Predicated region
    $region10: #{tpu_custom_call.1} parent=1 // pred_check
      _
    $region11: #{tpu_custom_call.1} parent=1 // pred_check_branch
      %20 = sbr.rel (0) target = $region13
    $region12: #{tpu_custom_call.1} parent=1 // pred_region
      _
    $region13: #{tpu_custom_call.1} parent=1 // pred_fallthru
      _
    // Predicated region
    $region14: #{tpu_custom_call.1} parent=1 // pred_check
      _
    $region15: #{tpu_custom_call.1} parent=1 // pred_check_branch
      %22 = sbr.rel (0) target = $region17
    $region16: #{tpu_custom_call.1} parent=1 // pred_region
      %s24 = ssub.s32 1024, 1024
      %25 = vsyncadd [#allocation3], %s24
      %s26 = sshll.u32 [#allocation2], 4
      %s27 = int_to_ptr.vmem [resolvable:$true] %s26
      %32 = dma.hbm_to_vmem [thread:$0]  %s3, 1024, %s27, [#allocation3], 64, 64, 4
    $region17: #{tpu_custom_call.1} parent=1 // pred_fallthru
      _
    // Predicated region
    $region18: #{tpu_custom_call.1} parent=1 // pred_check
      _
    $region19: #{tpu_custom_call.1} parent=1 // pred_check_branch
      %34 = sbr.rel (0) target = $region21
    $region20: #{tpu_custom_call.1} parent=1 // pred_region
      _
    $region21: #{tpu_custom_call.1} parent=1 // pred_fallthru
      _
    // Predicated region
    $region22: #{tpu_custom_call.1} parent=1 // pred_check
      _
    $region23: #{tpu_custom_call.1} parent=1 // pred_check_branch
      %36 = sbr.rel (0) target = $region25
    $region24: #{tpu_custom_call.1} parent=1 // pred_region
      %s38 = ssub.s32 1024, 1024
      %39 = vsyncadd [#allocation6], %s38
      %s40 = sshll.u32 [#allocation5], 4
      %s41 = int_to_ptr.vmem [resolvable:$true] %s40
      %46 = dma.hbm_to_vmem [thread:$0]  %s5, 1024, %s41, [#allocation6], 64, 64, 4
    $region25: #{tpu_custom_call.1} parent=1 // pred_fallthru
      _
    // Predicated region
    $region26: #{tpu_custom_call.1} parent=1 // pred_check
      _
    $region27: #{tpu_custom_call.1} parent=1 // pred_check_branch
      %48 = sbr.rel (0) target = $region29
    $region28: #{tpu_custom_call.1} parent=1 // pred_region
      _
    $region29: #{tpu_custom_call.1} parent=1 // pred_fallthru
      _
    // Predicated region
    $region30: #{tpu_custom_call.1} parent=1 // pred_check
      _
    $region31: #{tpu_custom_call.1} parent=1 // pred_check_branch
      %50 = sbr.rel (0) target = $region33
    $region32: #{tpu_custom_call.1} parent=1 // pred_region
      %51 = dma.done [#allocation3], 1024
    $region33: #{tpu_custom_call.1} parent=1 // pred_fallthru
      _
    // Predicated region
    $region34: #{tpu_custom_call.1} parent=1 // pred_check
      _
    $region35: #{tpu_custom_call.1} parent=1 // pred_check_branch
      %53 = sbr.rel (0) target = $region37
    $region36: #{tpu_custom_call.1} parent=1 // pred_region
      %54 = dma.done [#allocation6], 1024
    $region37: #{tpu_custom_call.1} parent=1 // pred_fallthru
      _
    %v56 = vld [vmem:[%s0] sm:$0xf]
    %v57 = vld [vmem:[%s1] sm:$0x3]
    %v58 = vld [vmem:[%s2] sm:$0x1]
    %v60 = vlaneseq
    %v61 = vshrl.u32 %v60, 7
    %v62 = vsub.s32 0, %v61
    %v63 = vrot.slane %v58, %v62
    %vm65 = vcmask 31744
    %v67 = vsel %vm65, %v56, 0
    %vm69 = vcmask 1041408
    %v71 = vsel %vm69, %v57, 0
    %73 = vmatprep.subr.bf16.mxu0 0
    %74 = vmatpush1.bf16.msra.mxu0 0
    %75 = vmatprep.subr.bf16.mxu0 0
    %76 = vmatpush1.bf16.msra.mxu0 0
    %77 = vmatprep.subr.bf16.mxu0 0
    %78 = vmatpush1.bf16.msra.mxu0 0
    %79 = vmatprep.subr.bf16.mxu0 0
    %80 = vmatpush1.bf16.msra.mxu0 0
    %81 = vmatprep.subr.bf16.mxu0 0
    %82 = vmatpush1.bf16.msra.mxu0 0
    %83 = vmatprep.subr.bf16.mxu0 0
    %84 = vmatpush1.bf16.msra.mxu0 0
    %85 = vmatprep.subr.bf16.mxu0 0
    %86 = vmatpush1.bf16.msra.mxu0 0
    %87 = vmatprep.subr.bf16.mxu0 0
    %88 = vmatpush1.bf16.msra.mxu0 %v71
    %89 = vmatprep.subr.bf16.mxu0 0
    %90 = vmatpush2.bf16.msra.mxu0 0
    %91 = vmatprep.subr.bf16.mxu0 0
    %92 = vmatpush2.bf16.msra.mxu0 0
    %93 = vmatprep.subr.bf16.mxu0 0
    %94 = vmatpush2.bf16.msra.mxu0 0
    %95 = vmatprep.subr.bf16.mxu0 0
    %96 = vmatpush2.bf16.msra.mxu0 0
    %97 = vmatprep.subr.bf16.mxu0 0
    %98 = vmatpush2.bf16.msra.mxu0 0
    %99 = vmatprep.subr.bf16.mxu0 0
    %100 = vmatpush2.bf16.msra.mxu0 0
    %101 = vmatprep.subr.bf16.mxu0 0
    %102 = vmatpush2.bf16.msra.mxu0 0
    %103 = vmatprep.subr.bf16.mxu0 0
    %104 = vmatpush2.bf16.msra.mxu0 0
    %105 = vmatprep.mubr.bf16.mxu0 0
    %106 = vmatmul.mubr.bf16.gmra.mxu0 %v67
    %v107 = vpop.f32.mrf.mxu0
    %v108 = vadd.f32 %v63, %v107
    %v109 = vpop.f32.mrf.mxu0
    %v110 = vpop.f32.mrf.mxu0
    %v111 = vpop.f32.mrf.mxu0
    %112 = vdwg.mxu0
    %v113 = vmax.f32 %v108, 0.0
    %v114 = vpack.c.bf16 %v113, %v113
    %v115 = vld [vmem:[#allocation2] sm:$0xf]
    %v116 = vld [vmem:[#allocation2 + $0x4] sm:$0xf]
    %v117 = vld [vmem:[#allocation2 + $0x8] sm:$0xf]
    %v118 = vld [vmem:[#allocation2 + $0xc] sm:$0xf]
    %v119 = vld [vmem:[#allocation2 + $0x10] sm:$0xf]
    %v120 = vld [vmem:[#allocation2 + $0x14] sm:$0xf]
    %v121 = vld [vmem:[#allocation2 + $0x18] sm:$0xf]
    %v122 = vld [vmem:[#allocation2 + $0x1c] sm:$0xf]
    %v123 = vld [vmem:[#allocation2 + $0x20] sm:$0xf]
    %v124 = vld [vmem:[#allocation2 + $0x24] sm:$0xf]
    %v125 = vld [vmem:[#allocation2 + $0x28] sm:$0xf]
    %v126 = vld [vmem:[#allocation2 + $0x2c] sm:$0xf]
    %v127 = vld [vmem:[#allocation2 + $0x30] sm:$0xf]
    %v128 = vld [vmem:[#allocation2 + $0x34] sm:$0xf]
    %v129 = vld [vmem:[#allocation2 + $0x38] sm:$0xf]
    %v130 = vld [vmem:[#allocation2 + $0x3c] sm:$0xf]
    %v131 = vld [vmem:[%s4] sm:$0x1]
    %v133 = vlaneseq
    %v134 = vshrl.u32 %v133, 7
    %v135 = vsub.s32 0, %v134
    %v136 = vrot.slane %v131, %v135
    %v154 = vunpack.c.l.b16 %v115
    %v155 = vunpack.c.l.b16 %v116
    %v156 = vunpack.c.l.b16 %v117
    %v157 = vunpack.c.l.b16 %v118
    %v158 = vunpack.c.l.b16 %v119
    %v159 = vunpack.c.l.b16 %v120
    %v160 = vunpack.c.l.b16 %v121
    %v161 = vunpack.c.l.b16 %v122
    %v162 = vunpack.c.l.b16 %v123
    %v163 = vunpack.c.l.b16 %v124
    %v164 = vunpack.c.l.b16 %v125
    %v165 = vunpack.c.l.b16 %v126
    %v166 = vunpack.c.l.b16 %v127
    %v167 = vunpack.c.l.b16 %v128
    %v168 = vunpack.c.l.b16 %v129
    %v169 = vunpack.c.l.b16 %v130
    %v170 = vpack.c.b16 %v155, %v154
    %v171 = vpack.c.b16 %v157, %v156
    %v172 = vpack.c.b16 %v159, %v158
    %v173 = vpack.c.b16 %v161, %v160
    %v174 = vpack.c.b16 %v163, %v162
    %v175 = vpack.c.b16 %v165, %v164
    %v176 = vpack.c.b16 %v167, %v166
    %v177 = vpack.c.b16 %v169, %v168
    %186 = vmatprep.subr.bf16.mxu0 0
    %187 = vmatpush1.bf16.msra.mxu0 %v177
    %188 = vmatprep.subr.bf16.mxu0 0
    %189 = vmatpush1.bf16.msra.mxu0 %v176
    %190 = vmatprep.subr.bf16.mxu0 0
    %191 = vmatpush1.bf16.msra.mxu0 %v175
    %192 = vmatprep.subr.bf16.mxu0 0
    %193 = vmatpush1.bf16.msra.mxu0 %v174
    %194 = vmatprep.subr.bf16.mxu0 0
    %195 = vmatpush1.bf16.msra.mxu0 %v173
    %196 = vmatprep.subr.bf16.mxu0 0
    %197 = vmatpush1.bf16.msra.mxu0 %v172
    %198 = vmatprep.subr.bf16.mxu0 0
    %199 = vmatpush1.bf16.msra.mxu0 %v171
    %200 = vmatprep.subr.bf16.mxu0 0
    %201 = vmatpush1.bf16.msra.mxu0 %v170
    %202 = vmatprep.subr.bf16.mxu0 0
    %203 = vmatpush2.bf16.msra.mxu0 0
    %204 = vmatprep.subr.bf16.mxu0 0
    %205 = vmatpush2.bf16.msra.mxu0 0
    %206 = vmatprep.subr.bf16.mxu0 0
    %207 = vmatpush2.bf16.msra.mxu0 0
    %208 = vmatprep.subr.bf16.mxu0 0
    %209 = vmatpush2.bf16.msra.mxu0 0
    %210 = vmatprep.subr.bf16.mxu0 0
    %211 = vmatpush2.bf16.msra.mxu0 0
    %212 = vmatprep.subr.bf16.mxu0 0
    %213 = vmatpush2.bf16.msra.mxu0 0
    %214 = vmatprep.subr.bf16.mxu0 0
    %215 = vmatpush2.bf16.msra.mxu0 0
    %216 = vmatprep.subr.bf16.mxu0 0
    %217 = vmatpush2.bf16.msra.mxu0 0
    %218 = vmatprep.mubr.bf16.mxu0 0
    %219 = vmatmul.mubr.bf16.gmra.mxu0 %v114
    %v220 = vpop.f32.mrf.mxu0
    %v221 = vadd.f32 %v136, %v220
    %v222 = vpop.f32.mrf.mxu0
    %v223 = vpop.f32.mrf.mxu0
    %v224 = vpop.f32.mrf.mxu0
    %225 = vdwg.mxu0
    %v226 = vmax.f32 %v221, 0.0
    %v227 = vpack.c.bf16 %v226, %v226
    %v228 = vld [vmem:[#allocation5] sm:$0xf]
    %v229 = vld [vmem:[#allocation5 + $0x4] sm:$0xf]
    %v230 = vld [vmem:[#allocation5 + $0x8] sm:$0xf]
    %v231 = vld [vmem:[#allocation5 + $0xc] sm:$0xf]
    %v232 = vld [vmem:[#allocation5 + $0x10] sm:$0xf]
    %v233 = vld [vmem:[#allocation5 + $0x14] sm:$0xf]
    %v234 = vld [vmem:[#allocation5 + $0x18] sm:$0xf]
    %v235 = vld [vmem:[#allocation5 + $0x1c] sm:$0xf]
    %v236 = vld [vmem:[#allocation5 + $0x20] sm:$0xf]
    %v237 = vld [vmem:[#allocation5 + $0x24] sm:$0xf]
    %v238 = vld [vmem:[#allocation5 + $0x28] sm:$0xf]
    %v239 = vld [vmem:[#allocation5 + $0x2c] sm:$0xf]
    %v240 = vld [vmem:[#allocation5 + $0x30] sm:$0xf]
    %v241 = vld [vmem:[#allocation5 + $0x34] sm:$0xf]
    %v242 = vld [vmem:[#allocation5 + $0x38] sm:$0xf]
    %v243 = vld [vmem:[#allocation5 + $0x3c] sm:$0xf]
    %v244 = vld [vmem:[%s6] sm:$0x1]
    %v246 = vlaneseq
    %v247 = vshrl.u32 %v246, 7
    %v248 = vsub.s32 0, %v247
    %v249 = vrot.slane %v244, %v248
    %v267 = vunpack.c.l.b16 %v228
    %v268 = vunpack.c.l.b16 %v229
    %v269 = vunpack.c.l.b16 %v230
    %v270 = vunpack.c.l.b16 %v231
    %v271 = vunpack.c.l.b16 %v232
    %v272 = vunpack.c.l.b16 %v233
    %v273 = vunpack.c.l.b16 %v234
    %v274 = vunpack.c.l.b16 %v235
    %v275 = vunpack.c.l.b16 %v236
    %v276 = vunpack.c.l.b16 %v237
    %v277 = vunpack.c.l.b16 %v238
    %v278 = vunpack.c.l.b16 %v239
    %v279 = vunpack.c.l.b16 %v240
    %v280 = vunpack.c.l.b16 %v241
    %v281 = vunpack.c.l.b16 %v242
    %v282 = vunpack.c.l.b16 %v243
    %v283 = vpack.c.b16 %v268, %v267
    %v284 = vpack.c.b16 %v270, %v269
    %v285 = vpack.c.b16 %v272, %v271
    %v286 = vpack.c.b16 %v274, %v273
    %v287 = vpack.c.b16 %v276, %v275
    %v288 = vpack.c.b16 %v278, %v277
    %v289 = vpack.c.b16 %v280, %v279
    %v290 = vpack.c.b16 %v282, %v281
    %299 = vmatprep.subr.bf16.mxu0 0
    %300 = vmatpush1.bf16.msra.mxu0 %v290
    %301 = vmatprep.subr.bf16.mxu0 0
    %302 = vmatpush1.bf16.msra.mxu0 %v289
    %303 = vmatprep.subr.bf16.mxu0 0
    %304 = vmatpush1.bf16.msra.mxu0 %v288
    %305 = vmatprep.subr.bf16.mxu0 0
    %306 = vmatpush1.bf16.msra.mxu0 %v287
    %307 = vmatprep.subr.bf16.mxu0 0
    %308 = vmatpush1.bf16.msra.mxu0 %v286
    %309 = vmatprep.subr.bf16.mxu0 0
    %310 = vmatpush1.bf16.msra.mxu0 %v285
    %311 = vmatprep.subr.bf16.mxu0 0
    %312 = vmatpush1.bf16.msra.mxu0 %v284
    %313 = vmatprep.subr.bf16.mxu0 0
    %314 = vmatpush1.bf16.msra.mxu0 %v283
    %315 = vmatprep.subr.bf16.mxu0 0
    %316 = vmatpush2.bf16.msra.mxu0 0
    %317 = vmatprep.subr.bf16.mxu0 0
    %318 = vmatpush2.bf16.msra.mxu0 0
    %319 = vmatprep.subr.bf16.mxu0 0
    %320 = vmatpush2.bf16.msra.mxu0 0
    %321 = vmatprep.subr.bf16.mxu0 0
    %322 = vmatpush2.bf16.msra.mxu0 0
    %323 = vmatprep.subr.bf16.mxu0 0
    %324 = vmatpush2.bf16.msra.mxu0 0
    %325 = vmatprep.subr.bf16.mxu0 0
    %326 = vmatpush2.bf16.msra.mxu0 0
    %327 = vmatprep.subr.bf16.mxu0 0
    %328 = vmatpush2.bf16.msra.mxu0 0
    %329 = vmatprep.subr.bf16.mxu0 0
    %330 = vmatpush2.bf16.msra.mxu0 0
    %331 = vmatprep.mubr.bf16.mxu0 0
    %332 = vmatmul.mubr.bf16.gmra.mxu0 %v227
    %v333 = vpop.f32.mrf.mxu0
    %v334 = vadd.f32 %v249, %v333
    %v335 = vpop.f32.mrf.mxu0
    %v336 = vpop.f32.mrf.mxu0
    %v337 = vpop.f32.mrf.mxu0
    %338 = vdwg.mxu0
    %339 = vst [vmem:[#allocation7] sm:$0xff] %v334
    // Predicated region
    $region38: #{tpu_custom_call.1} parent=1 // pred_check
      _
    $region39: #{tpu_custom_call.1} parent=1 // pred_check_branch
      %341 = sbr.rel (0) target = $region41
    $region40: #{tpu_custom_call.1} parent=1 // pred_region
      %s343 = ssub.s32 128, 128
      %344 = vsyncadd [#allocation4], %s343
      %s346 = sshll.u32 [#allocation7], 4
      %s347 = int_to_ptr.vmem [resolvable:$true] %s346
      %349 = dma.vmem_to_hbm [thread:$0]  %s347, 128, %s7, [#allocation4]
    $region41: #{tpu_custom_call.1} parent=1 // pred_fallthru
      _
    // Predicated region
    $region42: #{tpu_custom_call.1} parent=1 // pred_check
      _
    $region43: #{tpu_custom_call.1} parent=1 // pred_check_branch
      %351 = sbr.rel (0) target = $region45
    $region44: #{tpu_custom_call.1} parent=1 // pred_region
      %352 = dma.done [#allocation4], 128
    $region45: #{tpu_custom_call.1} parent=1 // pred_fallthru
      _
    %353 = vsyncpa [#allocation3], 1
    %354 = vsyncpa [#allocation6], 1
    %355 = vsyncpa [#allocation4], 1

</llo_original>
